<compile_context>
chip_gen: v7x
topology: tpu7x:2x2x1
jax: 0.10.0
libtpu: 0.0.40
codegen_flags: <defaults>
</compile_context>

<pallas_src>
import jax
import jax.numpy as jnp
from jax.experimental import pallas as pl
from jax.experimental.pallas import tpu as pltpu


def _round_up(n: int, m: int) -> int:
    return ((n + m - 1) // m) * m


# ----------------------------- Pallas kernel ---------------------------------

def _make_mlp_kernel(num_hidden: int, has_out: bool, activation: str):
    """Fused MLP forward kernel.

    Refs: x_ref (TB, D) bf16, w_ref (L, D, D) bf16, b_ref (L, 1, D) f32, o_ref (TB, D) f32.
    """
    if activation == "RELU":
        act = lambda v: jnp.maximum(v, 0.0)
    elif activation == "TANH":
        act = jnp.tanh
    else:
        raise ValueError(f"Unknown activation_type: {activation}")

    total = num_hidden + (1 if has_out else 0)

    def kernel(x_ref, w_ref, b_ref, o_ref):
        h = x_ref[...]                                   # bf16 (TB, D)
        for i in range(total):                           # statically unrolled layer chain
            acc = jnp.dot(h, w_ref[i], preferred_element_type=jnp.float32)  # MXU, f32 acc
            acc = acc + b_ref[i]                         # f32 bias, broadcast over batch
            is_predict = has_out and (i == total - 1)
            if not is_predict:
                acc = act(acc)                           # activation in f32 (VPU/EUP)
            if i < total - 1:
                h = acc.astype(jnp.bfloat16)             # back to bf16 for next MXU pass
            else:
                o_ref[...] = acc.astype(o_ref.dtype)     # lane-dense f32 store

    return kernel


# ----------------------------- Python wrapper ---------------------------------

def mlp_forward(x, params, config, *, batch_tile=1024):
    """MultiLayerPerceptron forward with a single batch-tiled fused Pallas call.

    x:      (B, ...) — flattened to (B, F) if config['reshape'] (plain-JAX glue).
    params: list of (W, b) with W in (in_features, out_features) layout, b in (out_features,).
    """
    if config.get("reshape", True):
        x = x.reshape(x.shape[0], -1)
    B, F = x.shape

    num_hidden = len(config["layers"])
    has_out = bool(config.get("out", None))
    out_dim = config["out"] if has_out else config["layers"][-1]

    # Uniform lane-aligned width for every layer (widths here are all comparable; weights
    # are tiny so the extra zero-padding VMEM is negligible).
    sizes = [F] + list(config["layers"]) + ([config["out"]] if has_out else [])
    D = _round_up(max(sizes), 128)
    L = len(params)

    # Pack per-layer params into stacked, zero-padded buffers (bf16 W, f32 b).
    w_layers = []
    b_layers = []
    for (w, b) in params:
        kin, kout = w.shape
        w_layers.append(jnp.pad(w.astype(jnp.bfloat16), ((0, D - kin), (0, D - kout))))
        b_layers.append(jnp.pad(b.astype(jnp.float32), (0, D - kout)).reshape(1, D))
    w_stack = jnp.stack(w_layers, axis=0)                # (L, D, D) bf16
    b_stack = jnp.stack(b_layers, axis=0)                # (L, 1, D) f32

    # Batch tile: large for big B (pipelined), sublane-padded single tile for tiny B.
    TB = int(batch_tile)
    if B <= TB:
        TB = max(8, _round_up(B, 8))
    B_pad = _round_up(B, TB)
    x_pad = jnp.pad(x.astype(jnp.bfloat16), ((0, B_pad - B), (0, D - F)))

    kernel = _make_mlp_kernel(num_hidden, has_out, config["activation"])
    grid = (B_pad // TB,)

    # Advisory cost for XLA's scheduler around the custom call.
    flops = 2 * B_pad * D * D * L
    transcendentals = B_pad * D * num_hidden if config["activation"] == "TANH" else 0
    bytes_accessed = (x_pad.size * 2 + w_stack.size * 2 + b_stack.size * 4 + B_pad * D * 4)

    # Double-buffered x (bf16) + out (f32) tiles plus resident params, with headroom.
    est_vmem = (2 * (TB * D * 2)            # x tiles (bf16, double-buffered)
                + 2 * (TB * D * 4)          # out tiles (f32, double-buffered)
                + 2 * (w_stack.size * 2 + b_stack.size * 4)   # params (worst case 2 bufs)
                + TB * D * 4)               # in-flight f32 accumulator
    vmem_limit = min(max(4 * est_vmem, 16 * 1024 * 1024), 64 * 1024 * 1024)

    out = pl.pallas_call(
        kernel,
        out_shape=jax.ShapeDtypeStruct((B_pad, D), jnp.float32),
        grid=grid,
        in_specs=[
            pl.BlockSpec((TB, D), lambda i: (i, 0)),        # activations: tiled over batch
            pl.BlockSpec((L, D, D), lambda i: (0, 0, 0)),   # weights: VMEM-resident
            pl.BlockSpec((L, 1, D), lambda i: (0, 0, 0)),   # biases:  VMEM-resident
        ],
        out_specs=pl.BlockSpec((TB, D), lambda i: (i, 0)),  # lane-dense (D multiple of 128)
        compiler_params=pltpu.CompilerParams(
            dimension_semantics=("parallel",),
            vmem_limit_bytes=int(vmem_limit),
        ),
        cost_estimate=pl.CostEstimate(
            flops=int(flops),
            transcendentals=int(transcendentals),
            bytes_accessed=int(bytes_accessed),
        ),
    )(x_pad, w_stack, b_stack)

    return out[:B, :out_dim]


# ----------------------------- Param init (deterministic) ---------------------

def init_mlp_params(key, config):
    """Xavier-uniform weights (matching the module's XAVIER reset), zero biases."""
    sizes = [config["in"]] + list(config["layers"])
    if config.get("out", None):
        sizes = sizes + [config["out"]]
    params = []
    for i in range(len(sizes) - 1):
        fan_in, fan_out = sizes[i], sizes[i + 1]
        key, sub = jax.random.split(key)
        limit = jnp.sqrt(6.0 / (fan_in + fan_out))
        w = jax.random.uniform(sub, (fan_in, fan_out), jnp.float32, -limit, limit)
        b = jnp.zeros((fan_out,), jnp.float32)
        params.append((w, b))
    return params


# ----------------------------- Pure-JAX references -----------------------------

def mlp_reference_f32(x, params, config):
    if config.get("reshape", True):
        x = x.reshape(x.shape[0], -1)
    act = (lambda v: jnp.maximum(v, 0.0)) if config["activation"] == "RELU" else jnp.tanh
    for i in range(len(config["layers"])):
        w, b = params[i]
        x = act(x @ w + b)
    if config.get("out", None):
        w, b = params[-1]
        x = x @ w + b
    return x


def mlp_reference_bf16(x, params, config):
    """Matches the kernel's numerics: bf16 MXU operands, f32 accumulate/bias/activation."""
    if config.get("reshape", True):
        x = x.reshape(x.shape[0], -1)
    act = (lambda v: jnp.maximum(v, 0.0)) if config["activation"] == "RELU" else jnp.tanh
    n_hidden = len(config["layers"])
    has_out = bool(config.get("out", None))
    total = n_hidden + (1 if has_out else 0)
    h = x.astype(jnp.bfloat16)
    for i in range(total):
        w, b = params[i]
        acc = jnp.dot(h, w.astype(jnp.bfloat16), preferred_element_type=jnp.float32) + b
        is_predict = has_out and (i == total - 1)
        if not is_predict:
            acc = act(acc)
        h = acc.astype(jnp.bfloat16) if i < total - 1 else acc
    return h


# ----------------------------- Main -------------------------------------------

if __name__ == "__main__":
    # Small shapes implied by forward(): input (B, 4, 16) flattens to (B, 64).
    B, C, S = 2, 4, 16
    config = {
        "in": C * S,            # 64
        "layers": [64, 64],
        "activation": "RELU",
        "reshape": True,
        "out": 8,
    }

    key = jax.random.PRNGKey(0)
    key_x, key_p = jax.random.split(key)
    x = jax.random.normal(key_x, (B, C, S), jnp.float32)
    params = init_mlp_params(key_p, config)

    y = jax.block_until_ready(mlp_forward(x, params, config))
    assert y.shape == (B, config["out"]), y.shape

    y_bf16 = mlp_reference_bf16(x, params, config)
    assert bool(jnp.allclose(y, y_bf16, atol=2e-3, rtol=2e-3)), "mismatch vs bf16-matched reference"

    y_f32 = mlp_reference_f32(x, params, config)
    assert bool(jnp.allclose(y, y_f32, atol=5e-2, rtol=5e-2)), "mismatch vs f32 reference"

    print("KERNEL_OK")
</pallas_src>

<mosaic_0001>
module attributes {stable_mosaic.version = 11 : i64} {
  func.func @kernel(%arg0: i32, %arg1: memref<8x128xbf16, #tpu.memory_space<vmem>>, %arg2: memref<3x128x128xbf16, #tpu.memory_space<vmem>>, %arg3: memref<3x1x128xf32, #tpu.memory_space<vmem>>, %arg4: memref<8x128xf32, #tpu.memory_space<vmem>>) attributes {dimension_semantics = [#tpu.dimension_semantics<parallel>], iteration_bounds = array<i64: 1>, scalar_prefetch = 0 : i64, scratch_operands = 0 : i64, tpu.core_type = #tpu.core_type<tc>, window_params = [{transform_indices = @transform_0, window_bounds = array<i64: 8, 128>}, {pipeline_mode = #tpu.pipeline_mode<synchronous>, transform_indices = @transform_1, window_bounds = array<i64: 3, 128, 128>}, {pipeline_mode = #tpu.pipeline_mode<synchronous>, transform_indices = @transform_2, window_bounds = array<i64: 3, 1, 128>}, {transform_indices = @transform_3, window_bounds = array<i64: 8, 128>}]} {
    %c0 = arith.constant 0 : index
    %c0_0 = arith.constant 0 : index
    %0 = vector.load %arg1[%c0, %c0_0] : memref<8x128xbf16, #tpu.memory_space<vmem>>, vector<8x128xbf16>
    %c0_1 = arith.constant 0 : index
    %c0_2 = arith.constant 0 : index
    %c0_3 = arith.constant 0 : index
    %1 = vector.load %arg2[%c0_1, %c0_2, %c0_3] : memref<3x128x128xbf16, #tpu.memory_space<vmem>>, vector<1x128x128xbf16>
    %2 = vector.shape_cast %1 : vector<1x128x128xbf16> to vector<128x128xbf16>
    %cst = arith.constant dense<0.000000e+00> : vector<8x128xf32>
    %3 = tpu.matmul %0, %2, %cst {dimension_numbers = #tpu.dot_dimension_numbers<[1], [0], [0], [1], [0, 0, 1, 1], [], []>} : vector<8x128xbf16>, vector<128x128xbf16>, vector<8x128xf32> -> vector<8x128xf32>
    %c0_4 = arith.constant 0 : index
    %c0_5 = arith.constant 0 : index
    %c0_6 = arith.constant 0 : index
    %4 = vector.load %arg3[%c0_4, %c0_5, %c0_6] : memref<3x1x128xf32, #tpu.memory_space<vmem>>, vector<1x1x128xf32>
    %5 = vector.shape_cast %4 : vector<1x1x128xf32> to vector<1x128xf32>
    %6 = vector.broadcast %5 : vector<1x128xf32> to vector<8x128xf32>
    %7 = arith.addf %3, %6 : vector<8x128xf32>
    %cst_7 = arith.constant 0.000000e+00 : f32
    %8 = vector.broadcast %cst_7 : f32 to vector<8x128xf32>
    %9 = arith.maximumf %7, %8 : vector<8x128xf32>
    %10 = arith.truncf %9 : vector<8x128xf32> to vector<8x128xbf16>
    %c1 = arith.constant 1 : index
    %c0_8 = arith.constant 0 : index
    %c0_9 = arith.constant 0 : index
    %11 = vector.load %arg2[%c1, %c0_8, %c0_9] : memref<3x128x128xbf16, #tpu.memory_space<vmem>>, vector<1x128x128xbf16>
    %12 = vector.shape_cast %11 : vector<1x128x128xbf16> to vector<128x128xbf16>
    %cst_10 = arith.constant dense<0.000000e+00> : vector<8x128xf32>
    %13 = tpu.matmul %10, %12, %cst_10 {dimension_numbers = #tpu.dot_dimension_numbers<[1], [0], [0], [1], [0, 0, 1, 1], [], []>} : vector<8x128xbf16>, vector<128x128xbf16>, vector<8x128xf32> -> vector<8x128xf32>
    %c1_11 = arith.constant 1 : index
    %c0_12 = arith.constant 0 : index
    %c0_13 = arith.constant 0 : index
    %14 = vector.load %arg3[%c1_11, %c0_12, %c0_13] : memref<3x1x128xf32, #tpu.memory_space<vmem>>, vector<1x1x128xf32>
    %15 = vector.shape_cast %14 : vector<1x1x128xf32> to vector<1x128xf32>
    %16 = vector.broadcast %15 : vector<1x128xf32> to vector<8x128xf32>
    %17 = arith.addf %13, %16 : vector<8x128xf32>
    %cst_14 = arith.constant 0.000000e+00 : f32
    %18 = vector.broadcast %cst_14 : f32 to vector<8x128xf32>
    %19 = arith.maximumf %17, %18 : vector<8x128xf32>
    %20 = arith.truncf %19 : vector<8x128xf32> to vector<8x128xbf16>
    %c2 = arith.constant 2 : index
    %c0_15 = arith.constant 0 : index
    %c0_16 = arith.constant 0 : index
    %21 = vector.load %arg2[%c2, %c0_15, %c0_16] : memref<3x128x128xbf16, #tpu.memory_space<vmem>>, vector<1x128x128xbf16>
    %22 = vector.shape_cast %21 : vector<1x128x128xbf16> to vector<128x128xbf16>
    %cst_17 = arith.constant dense<0.000000e+00> : vector<8x128xf32>
    %23 = tpu.matmul %20, %22, %cst_17 {dimension_numbers = #tpu.dot_dimension_numbers<[1], [0], [0], [1], [0, 0, 1, 1], [], []>} : vector<8x128xbf16>, vector<128x128xbf16>, vector<8x128xf32> -> vector<8x128xf32>
    %c2_18 = arith.constant 2 : index
    %c0_19 = arith.constant 0 : index
    %c0_20 = arith.constant 0 : index
    %24 = vector.load %arg3[%c2_18, %c0_19, %c0_20] : memref<3x1x128xf32, #tpu.memory_space<vmem>>, vector<1x1x128xf32>
    %25 = vector.shape_cast %24 : vector<1x1x128xf32> to vector<1x128xf32>
    %26 = vector.broadcast %25 : vector<1x128xf32> to vector<8x128xf32>
    %27 = arith.addf %23, %26 : vector<8x128xf32>
    %c0_21 = arith.constant 0 : index
    %c0_22 = arith.constant 0 : index
    %28 = vector.load %arg4[%c0_21, %c0_22] : memref<8x128xf32, #tpu.memory_space<vmem>>, vector<8x128xf32>
    tpu.vector_store %arg4[%c0_21, %c0_22], %27 {strides = array<i32>} : memref<8x128xf32, #tpu.memory_space<vmem>>, vector<8x128xf32>,
    return
  }
  func.func @transform_0(%arg0: i32) -> (i32, i32) {
    %c0_i32 = arith.constant 0 : i32
    %c0_i32_0 = arith.constant 0 : i32
    return %arg0, %c0_i32 : i32, i32
  }
  func.func @transform_1(%arg0: i32) -> (i32, i32, i32) {
    %c0_i32 = arith.constant 0 : i32
    %c0_i32_0 = arith.constant 0 : i32
    %c0_i32_1 = arith.constant 0 : i32
    %c0_i32_2 = arith.constant 0 : i32
    return %c0_i32, %c0_i32_0, %c0_i32_1 : i32, i32, i32
  }
  func.func @transform_2(%arg0: i32) -> (i32, i32, i32) {
    %c0_i32 = arith.constant 0 : i32
    %c0_i32_0 = arith.constant 0 : i32
    %c0_i32_1 = arith.constant 0 : i32
    %c0_i32_2 = arith.constant 0 : i32
    return %c0_i32, %c0_i32_0, %c0_i32_1 : i32, i32, i32
  }
  func.func @transform_3(%arg0: i32) -> (i32, i32) {
    %c0_i32 = arith.constant 0 : i32
    %c0_i32_0 = arith.constant 0 : i32
    return %arg0, %c0_i32 : i32, i32
  }
}

</mosaic_0001>

<llo_original>
// kernel: tpu_custom_call.1
$region0: #{tpu_custom_call.1}
  #allocation0 [shape = 'u32[]', space=smem, size = 0x4, offset = 0x4, fixed_abs, tag = 'smem constant byte address 0x4 - core index']
  #allocation1 [shape = 'u32[144,128]{1,0:T(1,128)}', space=vmem, size = 0x12000, scoped, tag = 'internal scratch']
  %s0 = inlined_call_operand.hbm [shape: bf16[8,128], index: 0, kind: input, shape index: {}]
  %s1 = inlined_call_operand.hbm [shape: bf16[3,128,128], index: 1, kind: input, shape index: {}]
  %s2 = inlined_call_operand.vmem [shape: f32[3,1,128], index: 2, kind: input, shape index: {}]
  %s3 = inlined_call_operand.hbm [shape: f32[8,128], index: 3, kind: output, shape index: {}]
  %s4 = sld [smem:[#allocation0]]
  $region30: #{tpu_custom_call.1} parent=0
    _
  %s6 = ssub.s32 1, %s4
  %s7 = scalar_select 0, %s6, %s4
  $region1: #{tpu_custom_call.1} parent=0
    #allocation2 [shape = 'u8[2048]{0}', space=vmem, size = 0x800, scoped, tag = 'input window, operand 0, single buffered']
    #allocation3 [shape = 's32[1]{0}', space=sflag, size = 0x4, scoped, tag = 'scoped memory for tpu_custom_call.1']
    #allocation4 [shape = 's32[1]{0}', space=sflag, size = 0x4, scoped, tag = 'scoped memory for tpu_custom_call.1']
    #allocation5 [shape = 'u8[98304]{0}', space=vmem, size = 0x18000, scoped, tag = 'input window, operand 1, single buffered']
    #allocation6 [shape = 's32[1]{0}', space=sflag, size = 0x4, scoped, tag = 'scoped memory for tpu_custom_call.1']
    #allocation7 [shape = 'u8[4096]{0}', space=vmem, size = 0x1000, scoped, tag = 'output window, operand 0, single buffered']
    %8 = vsyncpa [#allocation3], 0
    %9 = vsyncpa [#allocation6], 0
    %10 = vsyncpa [#allocation4], 0
    // Predicated region
    $region2: #{tpu_custom_call.1} parent=1 // pred_check
      _
    $region3: #{tpu_custom_call.1} parent=1 // pred_check_branch
      %12 = sbr.rel (0) target = $region5
    $region4: #{tpu_custom_call.1} parent=1 // pred_region
      %s14 = ssub.s32 64, 64
      %15 = vsyncadd [#allocation3], %s14
      %s17 = sshll.u32 [#allocation2], 4
      %s18 = int_to_ptr.vmem [resolvable:$true] %s17
      %20 = dma.hbm_to_vmem [thread:$0]  %s0, 64, %s18, [#allocation3]
    $region5: #{tpu_custom_call.1} parent=1 // pred_fallthru
      _
    // Predicated region
    $region6: #{tpu_custom_call.1} parent=1 // pred_check
      _
    $region7: #{tpu_custom_call.1} parent=1 // pred_check_branch
      %22 = sbr.rel (0) target = $region9
    $region8: #{tpu_custom_call.1} parent=1 // pred_region
      %s24 = ssub.s32 3072, 3072
      %25 = vsyncadd [#allocation6], %s24
      %s26 = sshll.u32 [#allocation5], 4
      %s27 = int_to_ptr.vmem [resolvable:$true] %s26
      %32 = dma.hbm_to_vmem [thread:$0]  %s1, 3072, %s27, [#allocation6], 64, 64, 4
    $region9: #{tpu_custom_call.1} parent=1 // pred_fallthru
      _
    // Predicated region
    $region10: #{tpu_custom_call.1} parent=1 // pred_check
      _
    $region11: #{tpu_custom_call.1} parent=1 // pred_check_branch
      %34 = sbr.rel (0) target = $region13
    $region12: #{tpu_custom_call.1} parent=1 // pred_region
      _
    $region13: #{tpu_custom_call.1} parent=1 // pred_fallthru
      _
    // Predicated region
    $region14: #{tpu_custom_call.1} parent=1 // pred_check
      _
    $region15: #{tpu_custom_call.1} parent=1 // pred_check_branch
      %36 = sbr.rel (0) target = $region17
    $region16: #{tpu_custom_call.1} parent=1 // pred_region
      %37 = dma.done [#allocation3], 64
    $region17: #{tpu_custom_call.1} parent=1 // pred_fallthru
      _
    // Predicated region
    $region18: #{tpu_custom_call.1} parent=1 // pred_check
      _
    $region19: #{tpu_custom_call.1} parent=1 // pred_check_branch
      %39 = sbr.rel (0) target = $region21
    $region20: #{tpu_custom_call.1} parent=1 // pred_region
      %40 = dma.done [#allocation6], 3072
    $region21: #{tpu_custom_call.1} parent=1 // pred_fallthru
      _
    %v42 = vld [vmem:[#allocation2] sm:$0xf]
    %v43 = vld [vmem:[#allocation5] sm:$0xf]
    %v44 = vld [vmem:[#allocation5 + $0x4] sm:$0xf]
    %v45 = vld [vmem:[#allocation5 + $0x8] sm:$0xf]
    %v46 = vld [vmem:[#allocation5 + $0xc] sm:$0xf]
    %v47 = vld [vmem:[#allocation5 + $0x10] sm:$0xf]
    %v48 = vld [vmem:[#allocation5 + $0x14] sm:$0xf]
    %v49 = vld [vmem:[#allocation5 + $0x18] sm:$0xf]
    %v50 = vld [vmem:[#allocation5 + $0x1c] sm:$0xf]
    %v51 = vld [vmem:[#allocation5 + $0x20] sm:$0xf]
    %v52 = vld [vmem:[#allocation5 + $0x24] sm:$0xf]
    %v53 = vld [vmem:[#allocation5 + $0x28] sm:$0xf]
    %v54 = vld [vmem:[#allocation5 + $0x2c] sm:$0xf]
    %v55 = vld [vmem:[#allocation5 + $0x30] sm:$0xf]
    %v56 = vld [vmem:[#allocation5 + $0x34] sm:$0xf]
    %v57 = vld [vmem:[#allocation5 + $0x38] sm:$0xf]
    %v58 = vld [vmem:[#allocation5 + $0x3c] sm:$0xf]
    %v59 = vld [vmem:[%s2] sm:$0x1]
    %v61 = vlaneseq
    %v62 = vshrl.u32 %v61, 7
    %v63 = vsub.s32 0, %v62
    %v64 = vrot.slane %v59, %v63
    %v82 = vunpack.c.l.b16 %v43
    %v83 = vunpack.c.l.b16 %v44
    %v84 = vunpack.c.l.b16 %v45
    %v85 = vunpack.c.l.b16 %v46
    %v86 = vunpack.c.l.b16 %v47
    %v87 = vunpack.c.l.b16 %v48
    %v88 = vunpack.c.l.b16 %v49
    %v89 = vunpack.c.l.b16 %v50
    %v90 = vunpack.c.l.b16 %v51
    %v91 = vunpack.c.l.b16 %v52
    %v92 = vunpack.c.l.b16 %v53
    %v93 = vunpack.c.l.b16 %v54
    %v94 = vunpack.c.l.b16 %v55
    %v95 = vunpack.c.l.b16 %v56
    %v96 = vunpack.c.l.b16 %v57
    %v97 = vunpack.c.l.b16 %v58
    %v98 = vpack.c.b16 %v83, %v82
    %v99 = vpack.c.b16 %v85, %v84
    %v100 = vpack.c.b16 %v87, %v86
    %v101 = vpack.c.b16 %v89, %v88
    %v102 = vpack.c.b16 %v91, %v90
    %v103 = vpack.c.b16 %v93, %v92
    %v104 = vpack.c.b16 %v95, %v94
    %v105 = vpack.c.b16 %v97, %v96
    %114 = vmatprep.subr.bf16.mxu0 0
    %115 = vmatpush1.bf16.msra.mxu0 %v98
    %116 = vmatprep.subr.bf16.mxu0 0
    %117 = vmatpush1.bf16.msra.mxu0 %v99
    %118 = vmatprep.subr.bf16.mxu0 0
    %119 = vmatpush1.bf16.msra.mxu0 %v100
    %120 = vmatprep.subr.bf16.mxu0 0
    %121 = vmatpush1.bf16.msra.mxu0 %v101
    %122 = vmatprep.subr.bf16.mxu0 0
    %123 = vmatpush1.bf16.msra.mxu0 %v102
    %124 = vmatprep.subr.bf16.mxu0 0
    %125 = vmatpush1.bf16.msra.mxu0 %v103
    %126 = vmatprep.subr.bf16.mxu0 0
    %127 = vmatpush1.bf16.msra.mxu0 %v104
    %128 = vmatprep.subr.bf16.mxu0 0
    %129 = vmatpush1.bf16.msra.mxu0 %v105
    %130 = vmatprep.subr.bf16.mxu0 0
    %131 = vmatpush1.bf16.msra.mxu0 0
    %132 = vmatprep.subr.bf16.mxu0 0
    %133 = vmatpush1.bf16.msra.mxu0 0
    %134 = vmatprep.subr.bf16.mxu0 0
    %135 = vmatpush1.bf16.msra.mxu0 0
    %136 = vmatprep.subr.bf16.mxu0 0
    %137 = vmatpush1.bf16.msra.mxu0 0
    %138 = vmatprep.subr.bf16.mxu0 0
    %139 = vmatpush1.bf16.msra.mxu0 0
    %140 = vmatprep.subr.bf16.mxu0 0
    %141 = vmatpush1.bf16.msra.mxu0 0
    %142 = vmatprep.subr.bf16.mxu0 0
    %143 = vmatpush1.bf16.msra.mxu0 0
    %144 = vmatprep.subr.bf16.mxu0 0
    %145 = vmatpush1.bf16.msra.mxu0 0
    %146 = vmatprep.mubr.bf16.mxu0 0
    %147 = vmatmul.mubr.bf16.gmra.mrb[0].mxu0 %v42
    %v148 = vpop.f32.mrb[0].mxu0
    %v149 = vadd.f32 %v64, %v148
    %v150 = vpop.f32.mrb[0].mxu0
    %v151 = vpop.f32.mrb[0].mxu0
    %v152 = vpop.f32.mrb[0].mxu0
    %153 = vdwg.mxu0
    %v154 = vmax.f32 %v149, 0.0
    %v155 = vpack.c.bf16 %v154, %v154
    %s156 = scalar_lea.vmem [#allocation5], 64
    %v157 = vld [vmem:[%s156] sm:$0xf]
    %v158 = vld [vmem:[%s156 + $0x4] sm:$0xf]
    %v159 = vld [vmem:[%s156 + $0x8] sm:$0xf]
    %v160 = vld [vmem:[%s156 + $0xc] sm:$0xf]
    %v161 = vld [vmem:[%s156 + $0x10] sm:$0xf]
    %v162 = vld [vmem:[%s156 + $0x14] sm:$0xf]
    %v163 = vld [vmem:[%s156 + $0x18] sm:$0xf]
    %v164 = vld [vmem:[%s156 + $0x1c] sm:$0xf]
    %v165 = vld [vmem:[%s156 + $0x20] sm:$0xf]
    %v166 = vld [vmem:[%s156 + $0x24] sm:$0xf]
    %v167 = vld [vmem:[%s156 + $0x28] sm:$0xf]
    %v168 = vld [vmem:[%s156 + $0x2c] sm:$0xf]
    %v169 = vld [vmem:[%s156 + $0x30] sm:$0xf]
    %v170 = vld [vmem:[%s156 + $0x34] sm:$0xf]
    %v171 = vld [vmem:[%s156 + $0x38] sm:$0xf]
    %v172 = vld [vmem:[%s156 + $0x3c] sm:$0xf]
    %s173 = scalar_lea.vmem %s2, 1
    %v174 = vld [vmem:[%s173] sm:$0x1]
    %v176 = vlaneseq
    %v177 = vshrl.u32 %v176, 7
    %v178 = vsub.s32 0, %v177
    %v179 = vrot.slane %v174, %v178
    %v197 = vunpack.c.l.b16 %v157
    %v198 = vunpack.c.l.b16 %v158
    %v199 = vunpack.c.l.b16 %v159
    %v200 = vunpack.c.l.b16 %v160
    %v201 = vunpack.c.l.b16 %v161
    %v202 = vunpack.c.l.b16 %v162
    %v203 = vunpack.c.l.b16 %v163
    %v204 = vunpack.c.l.b16 %v164
    %v205 = vunpack.c.l.b16 %v165
    %v206 = vunpack.c.l.b16 %v166
    %v207 = vunpack.c.l.b16 %v167
    %v208 = vunpack.c.l.b16 %v168
    %v209 = vunpack.c.l.b16 %v169
    %v210 = vunpack.c.l.b16 %v170
    %v211 = vunpack.c.l.b16 %v171
    %v212 = vunpack.c.l.b16 %v172
    %v213 = vpack.c.b16 %v198, %v197
    %v214 = vpack.c.b16 %v200, %v199
    %v215 = vpack.c.b16 %v202, %v201
    %v216 = vpack.c.b16 %v204, %v203
    %v217 = vpack.c.b16 %v206, %v205
    %v218 = vpack.c.b16 %v208, %v207
    %v219 = vpack.c.b16 %v210, %v209
    %v220 = vpack.c.b16 %v212, %v211
    %229 = vmatprep.subr.bf16.mxu0 0
    %230 = vmatpush1.bf16.msra.mxu0 %v213
    %231 = vmatprep.subr.bf16.mxu0 0
    %232 = vmatpush1.bf16.msra.mxu0 %v214
    %233 = vmatprep.subr.bf16.mxu0 0
    %234 = vmatpush1.bf16.msra.mxu0 %v215
    %235 = vmatprep.subr.bf16.mxu0 0
    %236 = vmatpush1.bf16.msra.mxu0 %v216
    %237 = vmatprep.subr.bf16.mxu0 0
    %238 = vmatpush1.bf16.msra.mxu0 %v217
    %239 = vmatprep.subr.bf16.mxu0 0
    %240 = vmatpush1.bf16.msra.mxu0 %v218
    %241 = vmatprep.subr.bf16.mxu0 0
    %242 = vmatpush1.bf16.msra.mxu0 %v219
    %243 = vmatprep.subr.bf16.mxu0 0
    %244 = vmatpush1.bf16.msra.mxu0 %v220
    %245 = vmatprep.subr.bf16.mxu0 0
    %246 = vmatpush1.bf16.msra.mxu0 0
    %247 = vmatprep.subr.bf16.mxu0 0
    %248 = vmatpush1.bf16.msra.mxu0 0
    %249 = vmatprep.subr.bf16.mxu0 0
    %250 = vmatpush1.bf16.msra.mxu0 0
    %251 = vmatprep.subr.bf16.mxu0 0
    %252 = vmatpush1.bf16.msra.mxu0 0
    %253 = vmatprep.subr.bf16.mxu0 0
    %254 = vmatpush1.bf16.msra.mxu0 0
    %255 = vmatprep.subr.bf16.mxu0 0
    %256 = vmatpush1.bf16.msra.mxu0 0
    %257 = vmatprep.subr.bf16.mxu0 0
    %258 = vmatpush1.bf16.msra.mxu0 0
    %259 = vmatprep.subr.bf16.mxu0 0
    %260 = vmatpush1.bf16.msra.mxu0 0
    %261 = vmatprep.mubr.bf16.mxu0 0
    %262 = vmatmul.mubr.bf16.gmra.mrb[0].mxu0 %v155
    %v263 = vpop.f32.mrb[0].mxu0
    %v264 = vadd.f32 %v179, %v263
    %v265 = vpop.f32.mrb[0].mxu0
    %v266 = vpop.f32.mrb[0].mxu0
    %v267 = vpop.f32.mrb[0].mxu0
    %268 = vdwg.mxu0
    %v269 = vmax.f32 %v264, 0.0
    %v270 = vpack.c.bf16 %v269, %v269
    %s271 = scalar_lea.vmem [#allocation5], 128
    %v272 = vld [vmem:[%s271] sm:$0xf]
    %v273 = vld [vmem:[%s271 + $0x4] sm:$0xf]
    %v274 = vld [vmem:[%s271 + $0x8] sm:$0xf]
    %v275 = vld [vmem:[%s271 + $0xc] sm:$0xf]
    %v276 = vld [vmem:[%s271 + $0x10] sm:$0xf]
    %v277 = vld [vmem:[%s271 + $0x14] sm:$0xf]
    %v278 = vld [vmem:[%s271 + $0x18] sm:$0xf]
    %v279 = vld [vmem:[%s271 + $0x1c] sm:$0xf]
    %v280 = vld [vmem:[%s271 + $0x20] sm:$0xf]
    %v281 = vld [vmem:[%s271 + $0x24] sm:$0xf]
    %v282 = vld [vmem:[%s271 + $0x28] sm:$0xf]
    %v283 = vld [vmem:[%s271 + $0x2c] sm:$0xf]
    %v284 = vld [vmem:[%s271 + $0x30] sm:$0xf]
    %v285 = vld [vmem:[%s271 + $0x34] sm:$0xf]
    %v286 = vld [vmem:[%s271 + $0x38] sm:$0xf]
    %v287 = vld [vmem:[%s271 + $0x3c] sm:$0xf]
    %s288 = scalar_lea.vmem %s2, 2
    %v289 = vld [vmem:[%s288] sm:$0x1]
    %v291 = vlaneseq
    %v292 = vshrl.u32 %v291, 7
    %v293 = vsub.s32 0, %v292
    %v294 = vrot.slane %v289, %v293
    %v312 = vunpack.c.l.b16 %v272
    %v313 = vunpack.c.l.b16 %v273
    %v314 = vunpack.c.l.b16 %v274
    %v315 = vunpack.c.l.b16 %v275
    %v316 = vunpack.c.l.b16 %v276
    %v317 = vunpack.c.l.b16 %v277
    %v318 = vunpack.c.l.b16 %v278
    %v319 = vunpack.c.l.b16 %v279
    %v320 = vunpack.c.l.b16 %v280
    %v321 = vunpack.c.l.b16 %v281
    %v322 = vunpack.c.l.b16 %v282
    %v323 = vunpack.c.l.b16 %v283
    %v324 = vunpack.c.l.b16 %v284
    %v325 = vunpack.c.l.b16 %v285
    %v326 = vunpack.c.l.b16 %v286
    %v327 = vunpack.c.l.b16 %v287
    %v328 = vpack.c.b16 %v313, %v312
    %v329 = vpack.c.b16 %v315, %v314
    %v330 = vpack.c.b16 %v317, %v316
    %v331 = vpack.c.b16 %v319, %v318
    %v332 = vpack.c.b16 %v321, %v320
    %v333 = vpack.c.b16 %v323, %v322
    %v334 = vpack.c.b16 %v325, %v324
    %v335 = vpack.c.b16 %v327, %v326
    %344 = vmatprep.subr.bf16.mxu0 0
    %345 = vmatpush1.bf16.msra.mxu0 %v328
    %346 = vmatprep.subr.bf16.mxu0 0
    %347 = vmatpush1.bf16.msra.mxu0 %v329
    %348 = vmatprep.subr.bf16.mxu0 0
    %349 = vmatpush1.bf16.msra.mxu0 %v330
    %350 = vmatprep.subr.bf16.mxu0 0
    %351 = vmatpush1.bf16.msra.mxu0 %v331
    %352 = vmatprep.subr.bf16.mxu0 0
    %353 = vmatpush1.bf16.msra.mxu0 %v332
    %354 = vmatprep.subr.bf16.mxu0 0
    %355 = vmatpush1.bf16.msra.mxu0 %v333
    %356 = vmatprep.subr.bf16.mxu0 0
    %357 = vmatpush1.bf16.msra.mxu0 %v334
    %358 = vmatprep.subr.bf16.mxu0 0
    %359 = vmatpush1.bf16.msra.mxu0 %v335
    %360 = vmatprep.subr.bf16.mxu0 0
    %361 = vmatpush1.bf16.msra.mxu0 0
    %362 = vmatprep.subr.bf16.mxu0 0
    %363 = vmatpush1.bf16.msra.mxu0 0
    %364 = vmatprep.subr.bf16.mxu0 0
    %365 = vmatpush1.bf16.msra.mxu0 0
    %366 = vmatprep.subr.bf16.mxu0 0
    %367 = vmatpush1.bf16.msra.mxu0 0
    %368 = vmatprep.subr.bf16.mxu0 0
    %369 = vmatpush1.bf16.msra.mxu0 0
    %370 = vmatprep.subr.bf16.mxu0 0
    %371 = vmatpush1.bf16.msra.mxu0 0
    %372 = vmatprep.subr.bf16.mxu0 0
    %373 = vmatpush1.bf16.msra.mxu0 0
    %374 = vmatprep.subr.bf16.mxu0 0
    %375 = vmatpush1.bf16.msra.mxu0 0
    %376 = vmatprep.mubr.bf16.mxu0 0
    %377 = vmatmul.mubr.bf16.gmra.mrb[0].mxu0 %v270
    %v378 = vpop.f32.mrb[0].mxu0
    %v379 = vadd.f32 %v294, %v378
    %v380 = vpop.f32.mrb[0].mxu0
    %v381 = vpop.f32.mrb[0].mxu0
    %v382 = vpop.f32.mrb[0].mxu0
    %383 = vdwg.mxu0
    %384 = vst [vmem:[#allocation7] sm:$0xff] %v379
    // Predicated region
    $region22: #{tpu_custom_call.1} parent=1 // pred_check
      _
    $region23: #{tpu_custom_call.1} parent=1 // pred_check_branch
      %386 = sbr.rel (0) target = $region25
    $region24: #{tpu_custom_call.1} parent=1 // pred_region
      %s388 = ssub.s32 128, 128
      %389 = vsyncadd [#allocation4], %s388
      %s391 = sshll.u32 [#allocation7], 4
      %s392 = int_to_ptr.vmem [resolvable:$true] %s391
      %394 = dma.vmem_to_hbm [thread:$0]  %s392, 128, %s3, [#allocation4]
    $region25: #{tpu_custom_call.1} parent=1 // pred_fallthru
      _
    // Predicated region
    $region26: #{tpu_custom_call.1} parent=1 // pred_check
      _
    $region27: #{tpu_custom_call.1} parent=1 // pred_check_branch
      %396 = sbr.rel (0) target = $region29
    $region28: #{tpu_custom_call.1} parent=1 // pred_region
      %397 = dma.done [#allocation4], 128
    $region29: #{tpu_custom_call.1} parent=1 // pred_fallthru
      _
    %398 = vsyncpa [#allocation3], 1
    %399 = vsyncpa [#allocation6], 1
    %400 = vsyncpa [#allocation4], 1

</llo_original>
